<compile_context>
chip_gen: v7x
topology: tpu7x:2x2x1
jax: 0.10.0
libtpu: 0.0.40
codegen_flags: <defaults>
</compile_context>

<pallas_src>
import functools

import jax
import jax.numpy as jnp
from jax.experimental import pallas as pl
from jax.experimental.pallas import tpu as pltpu


def _round_up(x, m):
    return ((x + m - 1) // m) * m


def _cdiv(a, b):
    return (a + b - 1) // b


def _fit_tile(dim, max_tile, align):
    """Pick (tile, padded_dim) for one matmul dimension.

    If the dim fits in one tile, the whole dim is one block (full-dim blocks
    are exempt from the (8, 128) divisibility rule) -> zero padding.
    Otherwise split into cdiv(dim, max_tile) near-equal tiles rounded up to
    `align`, which minimizes padding waste (e.g. M=520, max=512 -> tile=264,
    Mp=528 instead of tile=512, Mp=1024).
    """
    if dim <= max_tile:
        return dim, dim
    n_tiles = _cdiv(dim, max_tile)
    tile = _round_up(_cdiv(dim, n_tiles), align)
    return tile, _round_up(dim, tile)


def _fc_kernel_single_k(x_ref, w_ref, b_ref, o_ref, *, apply_relu):
    # Whole reduction in one step: no accumulator scratch, no pl.when.
    x = x_ref[...].astype(w_ref.dtype)  # bf16 MXU path when weights are bf16
    y = jnp.dot(x, w_ref[...], preferred_element_type=jnp.float32)
    y = y + b_ref[...].astype(jnp.float32)
    if apply_relu:
        y = jnp.maximum(y, 0.0)
    o_ref[...] = y.astype(o_ref.dtype)


def _fc_kernel_multi_k(x_ref, w_ref, b_ref, o_ref, acc_ref, *, apply_relu):
    k = pl.program_id(2)

    @pl.when(k == 0)
    def _():
        # Seed the accumulator with the broadcast bias: saves a full
        # tm x tn VPU add in the epilogue.
        acc_ref[...] = jnp.broadcast_to(
            b_ref[...].astype(jnp.float32), acc_ref.shape)

    x = x_ref[...].astype(w_ref.dtype)
    acc_ref[...] += jnp.dot(x, w_ref[...], preferred_element_type=jnp.float32)

    @pl.when(k == pl.num_programs(2) - 1)
    def _():
        y = acc_ref[...]
        if apply_relu:
            y = jnp.maximum(y, 0.0)
        o_ref[...] = y.astype(o_ref.dtype)


@functools.partial(
    jax.jit, static_argnames=("tile_m", "tile_n", "tile_k", "use_relu"))
def fc_forward(x, weight_t, bias, *, tile_m=512, tile_n=512, tile_k=2048,
               use_relu=True):
    """FC forward: relu(x @ weight_t + bias); dropout = identity (eval mode).

    x:        (B, S, in_size)     -- kept in its HBM dtype; cast in-kernel
    weight_t: (in_size, out_size) -- pre-transposed; store as bf16 for MXU path
    bias:     (out_size,)
    """
    B, S, K = x.shape
    Kw, N = weight_t.shape
    assert Kw == K, (Kw, K)
    M = B * S
    out_dtype = x.dtype

    x2d = x.reshape(M, K)
    b2d = bias.reshape(1, N)

    # Sublane packing: 8 rows per vreg for 32-bit data, 16 for 16-bit.
    m_align = 16 if jnp.dtype(x.dtype).itemsize == 2 else 8
    tm, Mp = _fit_tile(M, tile_m, m_align)
    tn, Np = _fit_tile(N, tile_n, 128)
    tk, Kp = _fit_tile(K, tile_k, 128)

    # Keep both v7x TensorCores busy: if the parallel (M, N) grid would be a
    # single block, split M in two when that costs no padding.
    if Mp // tm == 1 and Np // tn == 1 and Mp == M:
        tm_half = _round_up(_cdiv(M, 2), m_align)
        if tm_half < M and M % tm_half == 0:
            tm = tm_half

    # Zero-pad only when needed (zeros contribute nothing to the matmul; the
    # padded output rows/cols are sliced off below). Avoids jnp.pad's extra
    # HBM round trip in the common unpadded case.
    if (Mp, Kp) != (M, K):
        x2d = jnp.pad(x2d, ((0, Mp - M), (0, Kp - K)))
    if (Kp, Np) != (K, N):
        weight_t = jnp.pad(weight_t, ((0, Kp - K), (0, Np - N)))
    if Np != N:
        b2d = jnp.pad(b2d, ((0, 0), (0, Np - N)))

    grid_m, grid_n, grid_k = Mp // tm, Np // tn, Kp // tk

    cost = pl.CostEstimate(
        flops=2 * M * K * N,
        transcendentals=0,
        bytes_accessed=(M * K * jnp.dtype(x.dtype).itemsize
                        + K * N * jnp.dtype(weight_t.dtype).itemsize
                        + N * jnp.dtype(bias.dtype).itemsize
                        + M * N * jnp.dtype(out_dtype).itemsize),
    )

    if grid_k == 1:
        dim_sem = ("parallel", "parallel")
        grid_spec = pltpu.PrefetchScalarGridSpec(
            num_scalar_prefetch=0,
            grid=(grid_m, grid_n),
            in_specs=[
                pl.BlockSpec((tm, tk), lambda i, j: (i, 0)),  # x tile
                pl.BlockSpec((tk, tn), lambda i, j: (0, j)),  # weight tile
                pl.BlockSpec((1, tn), lambda i, j: (0, j)),   # bias tile
            ],
            out_specs=pl.BlockSpec((tm, tn), lambda i, j: (i, j)),
        )
        kernel = functools.partial(_fc_kernel_single_k, apply_relu=use_relu)
    else:
        dim_sem = ("parallel", "parallel", "arbitrary")
        grid_spec = pltpu.PrefetchScalarGridSpec(
            num_scalar_prefetch=0,
            grid=(grid_m, grid_n, grid_k),
            in_specs=[
                pl.BlockSpec((tm, tk), lambda i, j, k: (i, k)),  # x tile
                pl.BlockSpec((tk, tn), lambda i, j, k: (k, j)),  # weight tile
                pl.BlockSpec((1, tn), lambda i, j, k: (0, j)),   # bias tile
            ],
            out_specs=pl.BlockSpec((tm, tn), lambda i, j, k: (i, j)),
            scratch_shapes=[pltpu.VMEM((tm, tn), jnp.float32)],
        )
        kernel = functools.partial(_fc_kernel_multi_k, apply_relu=use_relu)

    out_padded = pl.pallas_call(
        kernel,
        out_shape=jax.ShapeDtypeStruct((Mp, Np), out_dtype),
        grid_spec=grid_spec,
        compiler_params=pltpu.CompilerParams(
            dimension_semantics=dim_sem,
            vmem_limit_bytes=48 * 1024 * 1024,
        ),
        cost_estimate=cost,
    )(x2d, weight_t, b2d)

    out2d = out_padded[:M, :N] if (Mp, Np) != (M, N) else out_padded
    return out2d.reshape(B, S, N)


def reference_fc(x, weight_t, bias, use_relu=True):
    y = jnp.einsum("bsk,kn->bsn", x.astype(jnp.float32),
                   weight_t.astype(jnp.float32)) + bias.astype(jnp.float32)
    return jnp.maximum(y, 0.0) if use_relu else y


if __name__ == "__main__":
    key = jax.random.PRNGKey(0)
    kx, kw, kb, kx2, kw2, kb2 = jax.random.split(key, 6)

    # --- Test 1: VQA-like FC shapes (B, S, in_size) -> (B, S, out_size). ---
    B, S, in_size, out_size = 2, 8, 32, 64
    x = jax.random.normal(kx, (B, S, in_size), dtype=jnp.float32)
    bound = 1.0 / jnp.sqrt(jnp.float32(in_size))
    weight_t = jax.random.uniform(
        kw, (in_size, out_size), minval=-bound, maxval=bound, dtype=jnp.float32)
    bias = jax.random.uniform(
        kb, (out_size,), minval=-bound, maxval=bound, dtype=jnp.float32)

    ref = reference_fc(x, weight_t, bias)

    # Production path: weights pre-cast to bf16 ONCE, outside the jitted fwd.
    weight_bf16 = weight_t.astype(jnp.bfloat16)
    out_bf16 = jax.block_until_ready(fc_forward(x, weight_bf16, bias))
    assert out_bf16.shape == (B, S, out_size)
    assert jnp.allclose(out_bf16, ref, atol=3e-2, rtol=3e-2), \
        "bf16 path mismatch vs reference"

    # f32 path (tight tolerance).
    out_f32 = jax.block_until_ready(fc_forward(x, weight_t, bias))
    assert jnp.allclose(out_f32, ref, atol=1e-5, rtol=1e-5), \
        "f32 path mismatch vs reference"

    # --- Test 2: force the multi-K accumulator path + padding + grid split. ---
    in2, out2 = 300, 200
    x2 = jax.random.normal(kx2, (B, S, in2), dtype=jnp.float32)
    bound2 = 1.0 / jnp.sqrt(jnp.float32(in2))
    w2 = jax.random.uniform(
        kw2, (in2, out2), minval=-bound2, maxval=bound2, dtype=jnp.float32)
    b2 = jax.random.uniform(
        kb2, (out2,), minval=-bound2, maxval=bound2, dtype=jnp.float32)

    ref2 = reference_fc(x2, w2, b2)
    out2_k = jax.block_until_ready(
        fc_forward(x2, w2, b2, tile_m=8, tile_n=128, tile_k=128))
    assert out2_k.shape == (B, S, out2)
    assert jnp.allclose(out2_k, ref2, atol=2e-4, rtol=2e-4), \
        "multi-K path mismatch vs reference"

    print("KERNEL_OK")
</pallas_src>

<mosaic_0001>
module attributes {stable_mosaic.version = 11 : i64} {
  func.func @_fc_kernel_single_k(%arg0: i32, %arg1: i32, %arg2: memref<8x32xf32, #tpu.memory_space<vmem>>, %arg3: memref<32x64xbf16, #tpu.memory_space<vmem>>, %arg4: memref<1x64xf32, #tpu.memory_space<vmem>>, %arg5: memref<8x64xf32, #tpu.memory_space<vmem>>) attributes {dimension_semantics = [#tpu.dimension_semantics<parallel>, #tpu.dimension_semantics<parallel>], iteration_bounds = array<i64: 2, 1>, scalar_prefetch = 0 : i64, scratch_operands = 0 : i64, tpu.core_type = #tpu.core_type<tc>, window_params = [{transform_indices = @transform_0, window_bounds = array<i64: 8, 32>}, {transform_indices = @transform_1, window_bounds = array<i64: 32, 64>}, {transform_indices = @transform_2, window_bounds = array<i64: 1, 64>}, {transform_indices = @transform_3, window_bounds = array<i64: 8, 64>}]} {
    %c0 = arith.constant 0 : index
    %c0_0 = arith.constant 0 : index
    %0 = vector.load %arg2[%c0, %c0_0] : memref<8x32xf32, #tpu.memory_space<vmem>>, vector<8x32xf32>
    %1 = arith.truncf %0 : vector<8x32xf32> to vector<8x32xbf16>
    %c0_1 = arith.constant 0 : index
    %c0_2 = arith.constant 0 : index
    %2 = vector.load %arg3[%c0_1, %c0_2] : memref<32x64xbf16, #tpu.memory_space<vmem>>, vector<32x64xbf16>
    %cst = arith.constant dense<0.000000e+00> : vector<8x64xf32>
    %3 = tpu.matmul %1, %2, %cst {dimension_numbers = #tpu.dot_dimension_numbers<[1], [0], [0], [1], [0, 0, 1, 1], [], []>} : vector<8x32xbf16>, vector<32x64xbf16>, vector<8x64xf32> -> vector<8x64xf32>
    %c0_3 = arith.constant 0 : index
    %c0_4 = arith.constant 0 : index
    %4 = vector.load %arg4[%c0_3, %c0_4] : memref<1x64xf32, #tpu.memory_space<vmem>>, vector<1x64xf32>
    %5 = vector.broadcast %4 : vector<1x64xf32> to vector<8x64xf32>
    %6 = arith.addf %3, %5 : vector<8x64xf32>
    %cst_5 = arith.constant 0.000000e+00 : f32
    %7 = vector.broadcast %cst_5 : f32 to vector<8x64xf32>
    %8 = arith.maximumf %6, %7 : vector<8x64xf32>
    %c0_6 = arith.constant 0 : index
    %c0_7 = arith.constant 0 : index
    %9 = vector.load %arg5[%c0_6, %c0_7] : memref<8x64xf32, #tpu.memory_space<vmem>>, vector<8x64xf32>
    tpu.vector_store %arg5[%c0_6, %c0_7], %8 {strides = array<i32>} : memref<8x64xf32, #tpu.memory_space<vmem>>, vector<8x64xf32>,
    return
  }
  func.func @transform_0(%arg0: i32, %arg1: i32) -> (i32, i32) {
    %c0_i32 = arith.constant 0 : i32
    %c0_i32_0 = arith.constant 0 : i32
    return %arg0, %c0_i32 : i32, i32
  }
  func.func @transform_1(%arg0: i32, %arg1: i32) -> (i32, i32) {
    %c0_i32 = arith.constant 0 : i32
    %c0_i32_0 = arith.constant 0 : i32
    return %c0_i32, %arg1 : i32, i32
  }
  func.func @transform_2(%arg0: i32, %arg1: i32) -> (i32, i32) {
    %c0_i32 = arith.constant 0 : i32
    %c0_i32_0 = arith.constant 0 : i32
    return %c0_i32, %arg1 : i32, i32
  }
  func.func @transform_3(%arg0: i32, %arg1: i32) -> (i32, i32) {
    %c0_i32 = arith.constant 0 : i32
    return %arg0, %arg1 : i32, i32
  }
}

</mosaic_0001>

<llo_original>
// kernel: fc_forward.1
$region0: #{fc_forward.1}
  #allocation0 [shape = 'u32[]', space=smem, size = 0x4, offset = 0x4, fixed_abs, tag = 'smem constant byte address 0x4 - core index']
  #allocation1 [shape = 'u32[144,128]{1,0:T(1,128)}', space=vmem, size = 0x12000, scoped, tag = 'internal scratch']
  %s0 = inlined_call_operand.hbm [shape: f32[16,32], index: 0, kind: input, shape index: {}]
  %s1 = inlined_call_operand.hbm [shape: bf16[32,64], index: 1, kind: input, shape index: {}]
  %s2 = inlined_call_operand.vmem [shape: f32[1,64], index: 2, kind: input, shape index: {}]
  %s3 = inlined_call_operand.hbm [shape: f32[16,64], index: 3, kind: output, shape index: {}]
  %s4 = sld [smem:[#allocation0]]
  $region53: #{fc_forward.1} parent=0
    _
  %s6 = ssub.s32 1, %s4
  %s7 = scalar_select 0, %s6, %s4
  $region1: #{fc_forward.1} parent=0
    #allocation2 [shape = 'u8[8192]{0}', space=vmem, size = 0x2000, scoped, tag = 'input window, operand 0']
    #allocation3 [shape = 's32[2]{0}', space=sflag, size = 0x8, scoped, tag = 'scoped memory for fc_forward.1']
    #allocation4 [shape = 's32[2]{0}', space=sflag, size = 0x8, scoped, tag = 'scoped memory for fc_forward.1']
    #allocation5 [shape = 'u8[8192]{0}', space=vmem, size = 0x2000, scoped, tag = 'input window, operand 1, single buffered']
    #allocation6 [shape = 's32[1]{0}', space=sflag, size = 0x4, scoped, tag = 'scoped memory for fc_forward.1']
    #allocation7 [shape = 'u8[8192]{0}', space=vmem, size = 0x2000, scoped, tag = 'output window, operand 0']
    %8 = vsyncpa [#allocation3], 0
    %s9 = scalar_lea.sflag [#allocation3], 1
    %10 = vsyncpa %s9, 0
    %11 = vsyncpa [#allocation6], 0
    %12 = vsyncpa [#allocation4], 0
    %s13 = scalar_lea.sflag [#allocation4], 1
    %14 = vsyncpa %s13, 0
    loop: start=0, step=1, limit=4
    $region2: #{fc_forward.1} parent=1 // loop_pre_header
      _
    $region3: #{fc_forward.1} parent=1 // loop_header
      %s16 = sphi 0, %s20
      %p17 = scmp.ge.s32.totalorder %s16, 4
      %s23 = sphi 0, %s35
      %s24 = sphi 0, %s31
      %s25 = sphi 0, %s23
      %s26 = sphi 0, %s24
      %s27 = sphi 0, %s25
      %s28 = sphi 0, %s26
      %s38 = sphi 0, %s40
      %s41 = sphi 0, %s38
      %s42 = sphi 0, %s41
      %s58 = sphi 0, %s42
      %s64 = sphi 0, %s66
      %s67 = sphi 0, %s64
      %s68 = sphi 0, %s67
      %s84 = sphi 0, %s68
      %s90 = sphi 0, %s92
      %s93 = sphi 0, %s90
      %s94 = sphi 0, %s93
      %s110 = sphi 0, %s94
      %s118 = sphi 0, %s120
      %s121 = sphi 0, %s118
      %s122 = sphi 0, %s121
      %s138 = sphi 0, %s122
    $region4: #{fc_forward.1} parent=1 // loop_header_branch
      %19 = sbr.rel (%p17) target = $region8
    $region5: #{fc_forward.1} parent=1 // loop_body
      %s21 = ssub.s32 %s16, 1
      %s22 = ssub.s32 %s16, 2
      %s29 = sadd.s32 1, %s24
      %p30 = scmp.ge.s32.totalorder %s29, 1
      %s31 = scalar_select %p30, 0, %s29
      %s32 = sadd.s32 1, %s23
      %s33 = scalar_select %p30, %s32, %s23
      %p34 = scmp.ge.s32.totalorder %s33, 2
      %s35 = scalar_select %p34, 0, %s33
      %s36 = ssub.s32 %s23, %s35
      %p37 = scmp.eq.s32.totalorder %s36, 0
      %s39 = sadd.s32 %s38, 1
      %s40 = scalar_select %p37, %s38, %s39
      %p43 = pneg %p37
      %p44 = scmp.eq.s32.totalorder %s16, 1
      %p45 = por %p43, %p44
      %p46 = scmp.ne.s32.totalorder %s38, %s41
      %p47 = scmp.eq.s32.totalorder %s16, 0
      %p48 = por %p46, %p47
      %p49 = scmp.ne.s32.totalorder %s38, %s41
      %p50 = scmp.eq.s32.totalorder %s21, 1
      %p51 = por %p49, %p50
      %p52 = scmp.ne.s32.totalorder %s41, %s42
      %p53 = scmp.eq.s32.totalorder %s21, 0
      %p54 = por %p52, %p53
      %p55 = scmp.ne.s32.totalorder %s41, %s42
      %p56 = scmp.eq.s32.totalorder %s22, 1
      %p57 = por %p55, %p56
      %p59 = scmp.ne.s32.totalorder %s42, %s58
      %p60 = scmp.eq.s32.totalorder %s22, 0
      %p61 = por %p59, %p60
      %s62 = ssub.s32 %s24, %s31
      %p63 = scmp.eq.s32.totalorder %s62, 0
      %s65 = sadd.s32 %s64, 1
      %s66 = scalar_select %p63, %s64, %s65
      %p69 = pneg %p63
      %p70 = scmp.eq.s32.totalorder %s16, 1
      %p71 = por %p69, %p70
      %p72 = scmp.ne.s32.totalorder %s64, %s67
      %p73 = scmp.eq.s32.totalorder %s16, 0
      %p74 = por %p72, %p73
      %p75 = scmp.ne.s32.totalorder %s64, %s67
      %p76 = scmp.eq.s32.totalorder %s21, 1
      %p77 = por %p75, %p76
      %p78 = scmp.ne.s32.totalorder %s67, %s68
      %p79 = scmp.eq.s32.totalorder %s21, 0
      %p80 = por %p78, %p79
      %p81 = scmp.ne.s32.totalorder %s67, %s68
      %p82 = scmp.eq.s32.totalorder %s22, 1
      %p83 = por %p81, %p82
      %p85 = scmp.ne.s32.totalorder %s68, %s84
      %p86 = scmp.eq.s32.totalorder %s22, 0
      %p87 = por %p85, %p86
      %s88 = ssub.s32 %s24, %s31
      %p89 = scmp.eq.s32.totalorder %s88, 0
      %s91 = sadd.s32 %s90, 1
      %s92 = scalar_select %p89, %s90, %s91
      %p95 = pneg %p89
      %p96 = scmp.eq.s32.totalorder %s16, 1
      %p97 = por %p95, %p96
      %p98 = scmp.ne.s32.totalorder %s90, %s93
      %p99 = scmp.eq.s32.totalorder %s16, 0
      %p100 = por %p98, %p99
      %p101 = scmp.ne.s32.totalorder %s90, %s93
      %p102 = scmp.eq.s32.totalorder %s21, 1
      %p103 = por %p101, %p102
      %p104 = scmp.ne.s32.totalorder %s93, %s94
      %p105 = scmp.eq.s32.totalorder %s21, 0
      %p106 = por %p104, %p105
      %p107 = scmp.ne.s32.totalorder %s93, %s94
      %p108 = scmp.eq.s32.totalorder %s22, 1
      %p109 = por %p107, %p108
      %p111 = scmp.ne.s32.totalorder %s94, %s110
      %p112 = scmp.eq.s32.totalorder %s22, 0
      %p113 = por %p111, %p112
      %s114 = ssub.s32 %s23, %s35
      %s115 = ssub.s32 %s24, %s31
      %s116 = sor.u32 %s114, %s115
      %p117 = scmp.eq.s32.totalorder %s116, 0
      %s119 = sadd.s32 %s118, 1
      %s120 = scalar_select %p117, %s118, %s119
      %p123 = pneg %p117
      %p124 = scmp.eq.s32.totalorder %s16, 1
      %p125 = por %p123, %p124
      %p126 = scmp.ne.s32.totalorder %s118, %s121
      %p127 = scmp.eq.s32.totalorder %s16, 0
      %p128 = por %p126, %p127
      %p129 = scmp.ne.s32.totalorder %s118, %s121
      %p130 = scmp.eq.s32.totalorder %s21, 1
      %p131 = por %p129, %p130
      %p132 = scmp.ne.s32.totalorder %s121, %s122
      %p133 = scmp.eq.s32.totalorder %s21, 0
      %p134 = por %p132, %p133
      %p135 = scmp.ne.s32.totalorder %s121, %s122
      %p136 = scmp.eq.s32.totalorder %s22, 1
      %p137 = por %p135, %p136
      %p139 = scmp.ne.s32.totalorder %s122, %s138
      %p140 = scmp.eq.s32.totalorder %s22, 0
      %p141 = por %p139, %p140
      %p142 = scmp.le.s32.totalorder 1, %s16
      %p143 = scmp.lt.s32.totalorder %s16, 3
      %p144 = pnand %p142, %p143
      %p145 = pneg %p144
      // Predicated region
      $region9: #{fc_forward.1} parent=5 // pred_check
        _
      $region10: #{fc_forward.1} parent=5 // pred_check_branch
        %147 = sbr.rel (%p144) target = $region12
      $region11: #{fc_forward.1} parent=5 // pred_region
        %s148 = ssub.s32 %s16, 1
        // Predicated region
        $region13: #{fc_forward.1} parent=11 // pred_check
          %p149 = pneg %p80
        $region14: #{fc_forward.1} parent=11 // pred_check_branch
          %151 = sbr.rel (%p149) target = $region16
        $region15: #{fc_forward.1} parent=11 // pred_region
          %s153 = ssub.s32 256, 256
          %154 = vsyncadd [#allocation6], %s153
          %s155 = smul.addr %s26, 64
          %s156 = scalar_lea.hbm %s1, %s155
          %s157 = sshll.u32 [#allocation5], 4
          %s158 = int_to_ptr.vmem [resolvable:$true] %s157
          %163 = dma.hbm_to_vmem [thread:$0]  %s156, 256, %s158, [#allocation6], 64, 64, 4
        $region16: #{fc_forward.1} parent=11 // pred_fallthru
          _
        // Predicated region
        $region17: #{fc_forward.1} parent=11 // pred_check
          %p164 = pneg %p106
        $region18: #{fc_forward.1} parent=11 // pred_check_branch
          %166 = sbr.rel (%p164) target = $region20
        $region19: #{fc_forward.1} parent=11 // pred_region
          %p167 = scmp.lt.s32.totalorder %s26, 0
          %s168 = scalar_select %p167, %s26, 0
          %s169 = scalar_lea.vmem %s2, %s168
        $region20: #{fc_forward.1} parent=11 // pred_fallthru
          _
      $region12: #{fc_forward.1} parent=5 // pred_fallthru
        _
      %p170 = scmp.lt.s32.totalorder %s16, 2
      // Predicated region
      $region21: #{fc_forward.1} parent=5 // pred_check
        %p171 = pneg %p170
      $region22: #{fc_forward.1} parent=5 // pred_check_branch
        %173 = sbr.rel (%p171) target = $region24
      $region23: #{fc_forward.1} parent=5 // pred_region
        // Predicated region
        $region25: #{fc_forward.1} parent=23 // pred_check
          %p174 = pneg %p48
        $region26: #{fc_forward.1} parent=23 // pred_check_branch
          %176 = sbr.rel (%p174) target = $region28
        $region27: #{fc_forward.1} parent=23 // pred_region
          %s177 = sand.u32 %s38, 1
          %s178 = scalar_lea.sflag [#allocation3], %s177
          %s179 = sand.u32 %s38, 1
          %s180 = smul.addr %s179, 8
          %s181 = scalar_lea.vmem [#allocation2], %s180
          %s183 = ssub.s32 128, 128
          %184 = vsyncadd %s178, %s183
          %s185 = smul.addr %s23, 128
          %s186 = scalar_lea.hbm %s0, %s185
          %s188 = sshll.u32 %s181, 4
          %s189 = int_to_ptr.vmem [resolvable:$true] %s188
          %191 = dma.hbm_to_vmem [thread:$0]  %s186, 128, %s189, %s178
        $region28: #{fc_forward.1} parent=23 // pred_fallthru
          _
      $region24: #{fc_forward.1} parent=5 // pred_fallthru
        _
      %p192 = scmp.le.s32.totalorder 1, %s16
      %p193 = scmp.lt.s32.totalorder %s16, 3
      %p194 = pnand %p192, %p193
      %p195 = pneg %p194
      // Predicated region
      $region29: #{fc_forward.1} parent=5 // pred_check
        _
      $region30: #{fc_forward.1} parent=5 // pred_check_branch
        %197 = sbr.rel (%p194) target = $region32
      $region31: #{fc_forward.1} parent=5 // pred_region
        %s198 = ssub.s32 %s16, 1
        %s199 = sand.u32 %s41, 1
        %s200 = scalar_lea.sflag [#allocation3], %s199
        %s201 = sand.u32 %s41, 1
        %s202 = smul.addr %s201, 8
        %s203 = scalar_lea.vmem [#allocation2], %s202
        // Predicated region
        $region33: #{fc_forward.1} parent=31 // pred_check
          %p204 = pneg %p54
        $region34: #{fc_forward.1} parent=31 // pred_check_branch
          %206 = sbr.rel (%p204) target = $region36
        $region35: #{fc_forward.1} parent=31 // pred_region
          %207 = dma.done %s200, 128
        $region36: #{fc_forward.1} parent=31 // pred_fallthru
          _
        // Predicated region
        $region37: #{fc_forward.1} parent=31 // pred_check
          %p208 = pneg %p80
        $region38: #{fc_forward.1} parent=31 // pred_check_branch
          %210 = sbr.rel (%p208) target = $region40
        $region39: #{fc_forward.1} parent=31 // pred_region
          %211 = dma.done [#allocation6], 256
        $region40: #{fc_forward.1} parent=31 // pred_fallthru
          _
        %s212 = sand.u32 %s41, 1
        %s213 = scalar_lea.sflag [#allocation3], %s212
        %s214 = sand.u32 %s41, 1
        %s215 = smul.addr %s214, 8
        %s216 = scalar_lea.vmem [#allocation2], %s215
        %p217 = pneg %p54
        %p218 = pneg %p51
        %p219 = pneg %p80
        %p220 = pneg %p77
        %p221 = scmp.lt.s32.totalorder %s26, 0
        %s222 = scalar_select %p221, %s26, 0
        %s223 = scalar_lea.vmem %s2, %s222
        %p224 = pneg %p106
        %p225 = pneg %p103
        %p226 = pneg %p134
        %p227 = pneg %p131
        %s228 = sand.u32 %s121, 1
        %s229 = scalar_lea.sflag [#allocation4], %s228
        %s230 = sand.u32 %s121, 1
        %s231 = smul.addr %s230, 8
        %s232 = scalar_lea.vmem [#allocation7], %s231
        %p233 = scmp.lt.s32.totalorder %s26, 0
        %s234 = scalar_select %p233, %s26, 0
        %s235 = scalar_lea.vmem %s2, %s234
        %v237 = vld [vmem:[%s203] sm:$0xff]
        %v238 = vpack.c.bf16 %v237, %v237
        %v239 = vld [vmem:[#allocation5] sm:$0xf]
        %v240 = vld [vmem:[#allocation5 + $0x4] sm:$0xf]
        %v241 = vld [vmem:[#allocation5 + $0x8] sm:$0xf]
        %v242 = vld [vmem:[#allocation5 + $0xc] sm:$0xf]
        %v243 = vld [vmem:[%s235] sm:$0x1]
        %v245 = vlaneseq
        %v246 = vshrl.u32 %v245, 7
        %v247 = vsub.s32 0, %v246
        %v248 = vrot.slane %v243, %v247
        %v254 = vunpack.c.l.b16 %v239
        %v255 = vunpack.c.l.b16 %v240
        %v256 = vunpack.c.l.b16 %v241
        %v257 = vunpack.c.l.b16 %v242
        %v258 = vpack.c.b16 %v255, %v254
        %v259 = vpack.c.b16 %v257, %v256
        %vm262 = vcmask 261120
        %v264 = vsel %vm262, %v238, 0
        %266 = vmatprep.subr.bf16.mxu0 0
        %267 = vmatpush1.bf16.msra.mxu0 %v258
        %268 = vmatprep.subr.bf16.mxu0 0
        %269 = vmatpush1.bf16.msra.mxu0 %v259
        %270 = vmatprep.subr.bf16.mxu0 0
        %271 = vmatpush1.bf16.msra.mxu0 0
        %272 = vmatprep.subr.bf16.mxu0 0
        %273 = vmatpush1.bf16.msra.mxu0 0
        %274 = vmatprep.subr.bf16.mxu0 0
        %275 = vmatpush1.bf16.msra.mxu0 0
        %276 = vmatprep.subr.bf16.mxu0 0
        %277 = vmatpush1.bf16.msra.mxu0 0
        %278 = vmatprep.subr.bf16.mxu0 0
        %279 = vmatpush1.bf16.msra.mxu0 0
        %280 = vmatprep.subr.bf16.mxu0 0
        %281 = vmatpush1.bf16.msra.mxu0 0
        %282 = vmatprep.subr.bf16.mxu0 0
        %283 = vmatpush1.bf16.msra.mxu0 0
        %284 = vmatprep.subr.bf16.mxu0 0
        %285 = vmatpush1.bf16.msra.mxu0 0
        %286 = vmatprep.subr.bf16.mxu0 0
        %287 = vmatpush1.bf16.msra.mxu0 0
        %288 = vmatprep.subr.bf16.mxu0 0
        %289 = vmatpush1.bf16.msra.mxu0 0
        %290 = vmatprep.subr.bf16.mxu0 0
        %291 = vmatpush1.bf16.msra.mxu0 0
        %292 = vmatprep.subr.bf16.mxu0 0
        %293 = vmatpush1.bf16.msra.mxu0 0
        %294 = vmatprep.subr.bf16.mxu0 0
        %295 = vmatpush1.bf16.msra.mxu0 0
        %296 = vmatprep.subr.bf16.mxu0 0
        %297 = vmatpush1.bf16.msra.mxu0 0
        %298 = vmatprep.mubr.bf16.mxu0 0
        %299 = vmatmul.mubr.bf16.gmra.mrb[0].mxu0 %v264
        %v300 = vpop.f32.mrb[0].mxu0
        %v301 = vadd.f32 %v248, %v300
        %v302 = vpop.f32.mrb[0].mxu0
        %v303 = vpop.f32.mrb[0].mxu0
        %v304 = vpop.f32.mrb[0].mxu0
        %305 = vdwg.mxu0
        %v306 = vmax.f32 %v301, 0.0
        %vm307 = vcmask 523264
        %308 = vst.msk [vmem:[%s232] sm:$0xff] %vm307, %v306
        %s309 = sand.u32 %s121, 1
        %s310 = scalar_lea.sflag [#allocation4], %s309
        %s311 = sand.u32 %s121, 1
        %s312 = smul.addr %s311, 8
        %s313 = scalar_lea.vmem [#allocation7], %s312
        // Predicated region
        $region41: #{fc_forward.1} parent=31 // pred_check
          %p314 = pneg %p131
        $region42: #{fc_forward.1} parent=31 // pred_check_branch
          %316 = sbr.rel (%p314) target = $region44
        $region43: #{fc_forward.1} parent=31 // pred_region
          %s318 = ssub.s32 128, 128
          %319 = vsyncadd %s310, %s318
          %s320 = sadd.s32 %s26, %s25
          %s321 = smul.addr %s320, 128
          %s322 = scalar_lea.hbm %s3, %s321
          %s324 = sshll.u32 %s313, 4
          %s325 = int_to_ptr.vmem [resolvable:$true] %s324
          %327 = dma.vmem_to_hbm [thread:$0]  %s325, 128, %s322, %s310
        $region44: #{fc_forward.1} parent=31 // pred_fallthru
          _
      $region32: #{fc_forward.1} parent=5 // pred_fallthru
        _
      %p328 = scmp.le.s32.totalorder 2, %s16
      // Predicated region
      $region45: #{fc_forward.1} parent=5 // pred_check
        %p329 = pneg %p328
      $region46: #{fc_forward.1} parent=5 // pred_check_branch
        %331 = sbr.rel (%p329) target = $region48
      $region47: #{fc_forward.1} parent=5 // pred_region
        %s332 = ssub.s32 %s16, 2
        // Predicated region
        $region49: #{fc_forward.1} parent=47 // pred_check
          %p333 = pneg %p137
        $region50: #{fc_forward.1} parent=47 // pred_check_branch
          %335 = sbr.rel (%p333) target = $region52
        $region51: #{fc_forward.1} parent=47 // pred_region
          %s336 = sand.u32 %s122, 1
          %s337 = scalar_lea.sflag [#allocation4], %s336
          %s338 = sand.u32 %s122, 1
          %s339 = smul.addr %s338, 8
          %s340 = scalar_lea.vmem [#allocation7], %s339
          %341 = dma.done %s337, 128
        $region52: #{fc_forward.1} parent=47 // pred_fallthru
          _
      $region48: #{fc_forward.1} parent=5 // pred_fallthru
        _
    $region6: #{fc_forward.1} parent=1 // loop_footer
      %s20 = sadd.s32 1, %s16
    $region7: #{fc_forward.1} parent=1 // loop_footer_branch
      %15 = sbr.rel target = $region3
    $region8: #{fc_forward.1} parent=1 // loop_exit
      _
    %342 = vsyncpa [#allocation3], 1
    %s343 = scalar_lea.sflag [#allocation3], 1
    %344 = vsyncpa %s343, 1
    %345 = vsyncpa [#allocation6], 1
    %346 = vsyncpa [#allocation4], 1
    %s347 = scalar_lea.sflag [#allocation4], 1
    %348 = vsyncpa %s347, 1

</llo_original>
